<compile_context>
chip_gen: v7x
topology: tpu7x:2x2x1
jax: 0.10.0
libtpu: 0.0.40
codegen_flags: <defaults>
</compile_context>

<pallas_src>
import jax
import jax.numpy as jnp
from jax import lax
from jax.experimental import pallas as pl
from jax.experimental.pallas import tpu as pltpu

EPS = 1e-5
NEG_SLOPE = 0.1


def _round_up(x, m):
    return (x + m - 1) // m * m


def _padded_bytes(rows, cols, itemsize):
    """Real VMEM footprint of a 2-D block: second-minor padded to 8, lane dim to 128."""
    return _round_up(max(rows, 1), 8) * _round_up(max(cols, 1), 128) * itemsize


def _pick_tr(nrows, hw, in_item, out_item, budget_bytes):
    """Largest row tile TR (divisor of nrows, multiple of 8 or == nrows) whose
    double-buffered, padding-aware in+out(+scale/shift) footprint fits the budget.
    Mild preference for >= 2 grid steps so the parallel grid can shard across the
    two TensorCores on v7x."""

    def need(t):
        i = _padded_bytes(t, hw, in_item)            # input block
        o = _padded_bytes(t, 8 * hw, out_item)       # output block (8x elements!)
        sb = 2 * _padded_bytes(t, 1, 4)              # scale + shift blocks
        return 2 * (i + o + sb)                      # x2: double buffering

    cand = [t for t in range(1, nrows + 1)
            if nrows % t == 0 and (t % 8 == 0 or t == nrows)]
    fits = [t for t in cand if need(t) <= budget_bytes]
    if not fits:
        tr = min(cand)                               # smallest legal tile; may still be big
    else:
        multi = [t for t in fits if nrows // t >= 2]
        tr = max(multi) if multi else max(fits)
    return tr, need(tr)


def _noconv_up_kernel(x_ref, scale_ref, shift_ref, up_ref, o_ref):
    # x_ref:     (TR, H*W)        one lane-dense row per (n, c, d) depth slice
    # scale_ref: (TR, 1)  f32     folded BN scale per row
    # shift_ref: (TR, 1)  f32     folded BN shift per row
    # up_ref:    (H*W, 4*H*W)     0/1 nearest-upsample matrix (HxW -> 2Hx2W, row-major)
    # o_ref:     (TR, 8*H*W)      [upsampled slice | same slice]  (the two D replicas)
    x = x_ref[...].astype(jnp.float32)
    y = x * scale_ref[...] + shift_ref[...]                  # BatchNorm (folded affine)
    y = jnp.where(y > 0, y, NEG_SLOPE * y)                   # LeakyReLU(0.1)
    y2 = jnp.dot(y, up_ref[...],
                 precision=lax.Precision.HIGHEST,            # exact 0/1 duplication
                 preferred_element_type=jnp.float32)         # (TR, 4*H*W)
    y2 = y2.astype(o_ref.dtype)
    o_ref[...] = jnp.concatenate([y2, y2], axis=-1)          # one dense, unmasked store


def noconv_up(x_ncdhw, gamma, beta):
    """x_ncdhw: (N, C, D, H, W) -> (N, C, 2D, 2H, 2W)  (BN -> LeakyReLU -> nearest x2)."""
    N, C, D, H, W = x_ncdhw.shape
    out_dtype = x_ncdhw.dtype
    HW = H * W
    nrows = N * C * D

    # ---- Pass 1: per-channel batch stats in ONE read of x (fused sum / sum-of-squares).
    xf = x_ncdhw.astype(jnp.float32)
    cnt = N * D * H * W
    s1 = jnp.sum(xf, axis=(0, 2, 3, 4))                                  # (C,)
    s2 = jnp.sum(xf * xf, axis=(0, 2, 3, 4))                             # (C,)
    mean = s1 / cnt
    var = jnp.maximum(s2 / cnt - mean * mean, 0.0)                       # biased var
    scale_c = gamma.reshape(C).astype(jnp.float32) * lax.rsqrt(var + EPS)
    shift_c = beta.reshape(C).astype(jnp.float32) - mean * scale_c

    # Per-row folded affine (broadcast over N and D): tiny (N*C*D, 1) arrays.
    scale_r = jnp.broadcast_to(scale_c[None, :, None], (N, C, D)).reshape(nrows, 1)
    shift_r = jnp.broadcast_to(shift_c[None, :, None], (N, C, D)).reshape(nrows, 1)

    # ---- Free (row-major preserving) views: no HBM traffic.
    x2 = x_ncdhw.reshape(nrows, HW)

    # 0/1 combined HxW nearest-upsample matrix: up[j, k] = 1 iff the flattened (2H,2W)
    # output position k samples flattened (H,W) input position j.
    k = jnp.arange(4 * HW)
    src = ((k // (2 * W)) // 2) * W + (k % (2 * W)) // 2
    up = (src[None, :] == jnp.arange(HW)[:, None]).astype(jnp.float32)   # (HW, 4HW)

    # ---- Generation-aware VMEM budgeting (padding + double-buffer + output included).
    try:
        vmem_cap = int(pltpu.get_tpu_info().vmem_capacity_bytes)
    except Exception:
        vmem_cap = 128 * 1024 * 1024
    itm_in = jnp.dtype(x_ncdhw.dtype).itemsize
    itm_out = jnp.dtype(out_dtype).itemsize
    up_bytes = 2 * _padded_bytes(HW, 4 * HW, 4)          # resident matrix (both buffers)
    tile_budget = max(min(vmem_cap // 2, 64 << 20) - up_bytes - (2 << 20), 2 << 20)
    TR, tiles_bytes = _pick_tr(nrows, HW, itm_in, itm_out, tile_budget)

    need = tiles_bytes + up_bytes + (1 << 20)
    vmem_limit = int(min(max(need * 5 // 4, 16 << 20), vmem_cap - (8 << 20)))

    grid = (nrows // TR,)
    out2 = pl.pallas_call(
        _noconv_up_kernel,
        out_shape=jax.ShapeDtypeStruct((nrows, 8 * HW), out_dtype),
        grid=grid,
        in_specs=[
            pl.BlockSpec((TR, HW), lambda r: (r, 0)),          # x rows
            pl.BlockSpec((TR, 1), lambda r: (r, 0)),           # scale
            pl.BlockSpec((TR, 1), lambda r: (r, 0)),           # shift
            pl.BlockSpec((HW, 4 * HW), lambda r: (0, 0)),      # upsample matrix, resident
        ],
        out_specs=pl.BlockSpec((TR, 8 * HW), lambda r: (r, 0)),
        compiler_params=pltpu.CompilerParams(
            dimension_semantics=("parallel",),
            vmem_limit_bytes=vmem_limit,
        ),
    )(x2, scale_r, shift_r, up)

    # Free view back to the PyTorch output shape.
    return out2.reshape(N, C, 2 * D, 2 * H, 2 * W)


def noconv_up_ref(x, gamma, beta):
    """Pure-JAX reference matching the PyTorch module semantics."""
    mean = jnp.mean(x, axis=(0, 2, 3, 4), keepdims=True)
    var = jnp.mean(jnp.square(x - mean), axis=(0, 2, 3, 4), keepdims=True)
    g = gamma.reshape(1, -1, 1, 1, 1)
    b = beta.reshape(1, -1, 1, 1, 1)
    y = (x - mean) / jnp.sqrt(var + EPS) * g + b
    y = jnp.where(y > 0, y, NEG_SLOPE * y)
    y = jnp.repeat(jnp.repeat(jnp.repeat(y, 2, axis=2), 2, axis=3), 2, axis=4)
    return y


if __name__ == "__main__":
    key = jax.random.PRNGKey(0)
    kx, kg, kb = jax.random.split(key, 3)

    N, C, D, H, W = 2, 4, 4, 8, 8
    x = jax.random.normal(kx, (N, C, D, H, W), dtype=jnp.float32)
    gamma = 1.0 + 0.1 * jax.random.normal(kg, (C,), dtype=jnp.float32)
    beta = 0.1 * jax.random.normal(kb, (C,), dtype=jnp.float32)

    out = jax.block_until_ready(noconv_up(x, gamma, beta))

    ref = noconv_up_ref(x, gamma, beta)
    assert out.shape == (N, C, 2 * D, 2 * H, 2 * W), out.shape
    assert jnp.allclose(out, ref, rtol=1e-4, atol=1e-4), float(jnp.max(jnp.abs(out - ref)))

    print("KERNEL_OK")
</pallas_src>

<mosaic_0001>
module attributes {stable_mosaic.version = 11 : i64} {
  func.func @_noconv_up_kernel(%arg0: i32, %arg1: memref<16x64xf32, #tpu.memory_space<vmem>>, %arg2: memref<16x1xf32, #tpu.memory_space<vmem>>, %arg3: memref<16x1xf32, #tpu.memory_space<vmem>>, %arg4: memref<64x256xf32, #tpu.memory_space<vmem>>, %arg5: memref<16x512xf32, #tpu.memory_space<vmem>>) attributes {dimension_semantics = [#tpu.dimension_semantics<parallel>], iteration_bounds = array<i64: 2>, scalar_prefetch = 0 : i64, scratch_operands = 0 : i64, tpu.core_type = #tpu.core_type<tc>, window_params = [{transform_indices = @transform_0, window_bounds = array<i64: 16, 64>}, {transform_indices = @transform_1, window_bounds = array<i64: 16, 1>}, {transform_indices = @transform_2, window_bounds = array<i64: 16, 1>}, {pipeline_mode = #tpu.pipeline_mode<synchronous>, transform_indices = @transform_3, window_bounds = array<i64: 64, 256>}, {transform_indices = @transform_4, window_bounds = array<i64: 16, 512>}]} {
    %c0 = arith.constant 0 : index
    %c0_0 = arith.constant 0 : index
    %0 = vector.load %arg1[%c0, %c0_0] : memref<16x64xf32, #tpu.memory_space<vmem>>, vector<16x64xf32>
    %c0_1 = arith.constant 0 : index
    %c0_2 = arith.constant 0 : index
    %1 = vector.load %arg2[%c0_1, %c0_2] : memref<16x1xf32, #tpu.memory_space<vmem>>, vector<16x1xf32>
    %2 = vector.broadcast %1 : vector<16x1xf32> to vector<16x64xf32>
    %3 = arith.mulf %0, %2 : vector<16x64xf32>
    %c0_3 = arith.constant 0 : index
    %c0_4 = arith.constant 0 : index
    %4 = vector.load %arg3[%c0_3, %c0_4] : memref<16x1xf32, #tpu.memory_space<vmem>>, vector<16x1xf32>
    %5 = vector.broadcast %4 : vector<16x1xf32> to vector<16x64xf32>
    %6 = arith.addf %3, %5 : vector<16x64xf32>
    %cst = arith.constant 0.000000e+00 : f32
    %7 = vector.broadcast %cst : f32 to vector<16x64xf32>
    %8 = arith.cmpf ogt, %6, %7 : vector<16x64xf32>
    %cst_5 = arith.constant 1.000000e-01 : f32
    %9 = vector.broadcast %cst_5 : f32 to vector<16x64xf32>
    %10 = arith.mulf %9, %6 : vector<16x64xf32>
    %11 = arith.select %8, %6, %10 : vector<16x64xi1>, vector<16x64xf32>
    %c0_6 = arith.constant 0 : index
    %c0_7 = arith.constant 0 : index
    %12 = vector.load %arg4[%c0_6, %c0_7] : memref<64x256xf32, #tpu.memory_space<vmem>>, vector<64x256xf32>
    %cst_8 = arith.constant dense<0.000000e+00> : vector<16x256xf32>
    %13 = tpu.matmul %11, %12, %cst_8 {dimension_numbers = #tpu.dot_dimension_numbers<[1], [0], [0], [1], [0, 0, 1, 1], [], []>, precision = #tpu.contract_precision<fp32>} : vector<16x64xf32>, vector<64x256xf32>, vector<16x256xf32> -> vector<16x256xf32>
    %14 = tpu.concatenate %13, %13 in 1 : vector<16x256xf32>, vector<16x256xf32> -> vector<16x512xf32>
    %c0_9 = arith.constant 0 : index
    %c0_10 = arith.constant 0 : index
    %15 = vector.load %arg5[%c0_9, %c0_10] : memref<16x512xf32, #tpu.memory_space<vmem>>, vector<16x512xf32>
    tpu.vector_store %arg5[%c0_9, %c0_10], %14 {strides = array<i32>} : memref<16x512xf32, #tpu.memory_space<vmem>>, vector<16x512xf32>,
    return
  }
  func.func @transform_0(%arg0: i32) -> (i32, i32) {
    %c0_i32 = arith.constant 0 : i32
    %c0_i32_0 = arith.constant 0 : i32
    return %arg0, %c0_i32 : i32, i32
  }
  func.func @transform_1(%arg0: i32) -> (i32, i32) {
    %c0_i32 = arith.constant 0 : i32
    %c0_i32_0 = arith.constant 0 : i32
    return %arg0, %c0_i32 : i32, i32
  }
  func.func @transform_2(%arg0: i32) -> (i32, i32) {
    %c0_i32 = arith.constant 0 : i32
    %c0_i32_0 = arith.constant 0 : i32
    return %arg0, %c0_i32 : i32, i32
  }
  func.func @transform_3(%arg0: i32) -> (i32, i32) {
    %c0_i32 = arith.constant 0 : i32
    %c0_i32_0 = arith.constant 0 : i32
    %c0_i32_1 = arith.constant 0 : i32
    return %c0_i32, %c0_i32_0 : i32, i32
  }
  func.func @transform_4(%arg0: i32) -> (i32, i32) {
    %c0_i32 = arith.constant 0 : i32
    %c0_i32_0 = arith.constant 0 : i32
    return %arg0, %c0_i32 : i32, i32
  }
}

</mosaic_0001>

<llo_original>
// kernel: tpu_custom_call.1
$region0: #{tpu_custom_call.1}
  #allocation0 [shape = 'u32[]', space=smem, size = 0x4, offset = 0x4, fixed_abs, tag = 'smem constant byte address 0x4 - core index']
  #allocation1 [shape = 'u32[144,128]{1,0:T(1,128)}', space=vmem, size = 0x12000, scoped, tag = 'internal scratch']
  %s0 = inlined_call_operand.vmem [shape: f32[32,64], index: 0, kind: input, shape index: {}]
  %s1 = inlined_call_operand.vmem [shape: f32[32,1], index: 1, kind: input, shape index: {}]
  %s2 = inlined_call_operand.vmem [shape: f32[32,1], index: 2, kind: input, shape index: {}]
  %s3 = inlined_call_operand.hbm [shape: f32[64,256], index: 3, kind: input, shape index: {}]
  %s4 = inlined_call_operand.hbm [shape: f32[32,512], index: 4, kind: output, shape index: {}]
  %s5 = sld [smem:[#allocation0]]
  $region53: #{tpu_custom_call.1} parent=0
    _
  %s7 = ssub.s32 1, %s5
  %s8 = scalar_select 0, %s7, %s5
  $region1: #{tpu_custom_call.1} parent=0
    #allocation2 [shape = 'u8[65536]{0}', space=vmem, size = 0x10000, scoped, tag = 'input window, operand 3, single buffered']
    #allocation3 [shape = 's32[2]{0}', space=sflag, size = 0x8, scoped, tag = 'scoped memory for tpu_custom_call.1']
    #allocation4 [shape = 's32[2]{0}', space=sflag, size = 0x8, scoped, tag = 'scoped memory for tpu_custom_call.1']
    #allocation5 [shape = 'u8[65536]{0}', space=vmem, size = 0x10000, scoped, tag = 'output window, operand 0']
    %9 = vsyncpa [#allocation3], 0
    %10 = vsyncpa [#allocation4], 0
    %s11 = scalar_lea.sflag [#allocation4], 1
    %12 = vsyncpa %s11, 0
    loop: start=0, step=1, limit=4
    $region2: #{tpu_custom_call.1} parent=1 // loop_pre_header
      _
    $region3: #{tpu_custom_call.1} parent=1 // loop_header
      %s14 = sphi 0, %s18
      %p15 = scmp.ge.s32.totalorder %s14, 4
      %s24 = sphi 0, %s26
      %s27 = sphi 0, %s24
      %s28 = sphi 0, %s27
      %s44 = sphi 0, %s28
      %s50 = sphi 0, %s52
      %s53 = sphi 0, %s50
      %s54 = sphi 0, %s53
      %s70 = sphi 0, %s54
      %s76 = sphi 0, %s78
      %s79 = sphi 0, %s76
      %s80 = sphi 0, %s79
      %s96 = sphi 0, %s80
      %s100 = sphi 0, %s100
      %s102 = sphi 0, %s100
      %s103 = sphi 0, %s102
      %s117 = sphi 0, %s103
      %s123 = sphi 0, %s125
      %s126 = sphi 0, %s123
      %s127 = sphi 0, %s126
      %s143 = sphi 0, %s127
    $region4: #{tpu_custom_call.1} parent=1 // loop_header_branch
      %17 = sbr.rel (%p15) target = $region8
    $region5: #{tpu_custom_call.1} parent=1 // loop_body
      %s19 = ssub.s32 %s14, 1
      %s20 = ssub.s32 %s14, 2
      %s21 = sadd.s32 %s14, 1
      %s22 = ssub.s32 %s14, %s21
      %p23 = scmp.eq.s32.totalorder %s22, 0
      %s25 = sadd.s32 %s24, 1
      %s26 = scalar_select %p23, %s24, %s25
      %p29 = pneg %p23
      %p30 = scmp.eq.s32.totalorder %s14, 1
      %p31 = por %p29, %p30
      %p32 = scmp.ne.s32.totalorder %s24, %s27
      %p33 = scmp.eq.s32.totalorder %s14, 0
      %p34 = por %p32, %p33
      %p35 = scmp.ne.s32.totalorder %s24, %s27
      %p36 = scmp.eq.s32.totalorder %s19, 1
      %p37 = por %p35, %p36
      %p38 = scmp.ne.s32.totalorder %s27, %s28
      %p39 = scmp.eq.s32.totalorder %s19, 0
      %p40 = por %p38, %p39
      %p41 = scmp.ne.s32.totalorder %s27, %s28
      %p42 = scmp.eq.s32.totalorder %s20, 1
      %p43 = por %p41, %p42
      %p45 = scmp.ne.s32.totalorder %s28, %s44
      %p46 = scmp.eq.s32.totalorder %s20, 0
      %p47 = por %p45, %p46
      %s48 = ssub.s32 %s14, %s21
      %p49 = scmp.eq.s32.totalorder %s48, 0
      %s51 = sadd.s32 %s50, 1
      %s52 = scalar_select %p49, %s50, %s51
      %p55 = pneg %p49
      %p56 = scmp.eq.s32.totalorder %s14, 1
      %p57 = por %p55, %p56
      %p58 = scmp.ne.s32.totalorder %s50, %s53
      %p59 = scmp.eq.s32.totalorder %s14, 0
      %p60 = por %p58, %p59
      %p61 = scmp.ne.s32.totalorder %s50, %s53
      %p62 = scmp.eq.s32.totalorder %s19, 1
      %p63 = por %p61, %p62
      %p64 = scmp.ne.s32.totalorder %s53, %s54
      %p65 = scmp.eq.s32.totalorder %s19, 0
      %p66 = por %p64, %p65
      %p67 = scmp.ne.s32.totalorder %s53, %s54
      %p68 = scmp.eq.s32.totalorder %s20, 1
      %p69 = por %p67, %p68
      %p71 = scmp.ne.s32.totalorder %s54, %s70
      %p72 = scmp.eq.s32.totalorder %s20, 0
      %p73 = por %p71, %p72
      %s74 = ssub.s32 %s14, %s21
      %p75 = scmp.eq.s32.totalorder %s74, 0
      %s77 = sadd.s32 %s76, 1
      %s78 = scalar_select %p75, %s76, %s77
      %p81 = pneg %p75
      %p82 = scmp.eq.s32.totalorder %s14, 1
      %p83 = por %p81, %p82
      %p84 = scmp.ne.s32.totalorder %s76, %s79
      %p85 = scmp.eq.s32.totalorder %s14, 0
      %p86 = por %p84, %p85
      %p87 = scmp.ne.s32.totalorder %s76, %s79
      %p88 = scmp.eq.s32.totalorder %s19, 1
      %p89 = por %p87, %p88
      %p90 = scmp.ne.s32.totalorder %s79, %s80
      %p91 = scmp.eq.s32.totalorder %s19, 0
      %p92 = por %p90, %p91
      %p93 = scmp.ne.s32.totalorder %s79, %s80
      %p94 = scmp.eq.s32.totalorder %s20, 1
      %p95 = por %p93, %p94
      %p97 = scmp.ne.s32.totalorder %s80, %s96
      %p98 = scmp.eq.s32.totalorder %s20, 0
      %p99 = por %p97, %p98
      %s101 = sadd.s32 %s100, 1
      %p104 = scmp.eq.s32.totalorder %s14, 1
      %p105 = scmp.ne.s32.totalorder %s100, %s102
      %p106 = scmp.eq.s32.totalorder %s14, 0
      %p107 = por %p105, %p106
      %p108 = scmp.ne.s32.totalorder %s100, %s102
      %p109 = scmp.eq.s32.totalorder %s19, 1
      %p110 = por %p108, %p109
      %p111 = scmp.ne.s32.totalorder %s102, %s103
      %p112 = scmp.eq.s32.totalorder %s19, 0
      %p113 = por %p111, %p112
      %p114 = scmp.ne.s32.totalorder %s102, %s103
      %p115 = scmp.eq.s32.totalorder %s20, 1
      %p116 = por %p114, %p115
      %p118 = scmp.ne.s32.totalorder %s103, %s117
      %p119 = scmp.eq.s32.totalorder %s20, 0
      %p120 = por %p118, %p119
      %s121 = ssub.s32 %s14, %s21
      %p122 = scmp.eq.s32.totalorder %s121, 0
      %s124 = sadd.s32 %s123, 1
      %s125 = scalar_select %p122, %s123, %s124
      %p128 = pneg %p122
      %p129 = scmp.eq.s32.totalorder %s14, 1
      %p130 = por %p128, %p129
      %p131 = scmp.ne.s32.totalorder %s123, %s126
      %p132 = scmp.eq.s32.totalorder %s14, 0
      %p133 = por %p131, %p132
      %p134 = scmp.ne.s32.totalorder %s123, %s126
      %p135 = scmp.eq.s32.totalorder %s19, 1
      %p136 = por %p134, %p135
      %p137 = scmp.ne.s32.totalorder %s126, %s127
      %p138 = scmp.eq.s32.totalorder %s19, 0
      %p139 = por %p137, %p138
      %p140 = scmp.ne.s32.totalorder %s126, %s127
      %p141 = scmp.eq.s32.totalorder %s20, 1
      %p142 = por %p140, %p141
      %p144 = scmp.ne.s32.totalorder %s127, %s143
      %p145 = scmp.eq.s32.totalorder %s20, 0
      %p146 = por %p144, %p145
      %p147 = scmp.le.s32.totalorder 1, %s14
      %p148 = scmp.lt.s32.totalorder %s14, 3
      %p149 = pnand %p147, %p148
      %p150 = pneg %p149
      // Predicated region
      $region9: #{tpu_custom_call.1} parent=5 // pred_check
        _
      $region10: #{tpu_custom_call.1} parent=5 // pred_check_branch
        %152 = sbr.rel (%p149) target = $region12
      $region11: #{tpu_custom_call.1} parent=5 // pred_region
        %s153 = ssub.s32 %s14, 1
        // Predicated region
        $region13: #{tpu_custom_call.1} parent=11 // pred_check
          %p154 = pneg %p113
        $region14: #{tpu_custom_call.1} parent=11 // pred_check_branch
          %156 = sbr.rel (%p154) target = $region16
        $region15: #{tpu_custom_call.1} parent=11 // pred_region
          %s158 = ssub.s32 2048, 2048
          %159 = vsyncadd [#allocation3], %s158
          %s160 = sshll.u32 [#allocation2], 4
          %s161 = int_to_ptr.vmem [resolvable:$true] %s160
          %166 = dma.hbm_to_vmem [thread:$0]  %s3, 2048, %s161, [#allocation3], 256, 256, 16
        $region16: #{tpu_custom_call.1} parent=11 // pred_fallthru
          _
      $region12: #{tpu_custom_call.1} parent=5 // pred_fallthru
        _
      %p167 = scmp.lt.s32.totalorder %s14, 2
      // Predicated region
      $region17: #{tpu_custom_call.1} parent=5 // pred_check
        %p168 = pneg %p167
      $region18: #{tpu_custom_call.1} parent=5 // pred_check_branch
        %170 = sbr.rel (%p168) target = $region20
      $region19: #{tpu_custom_call.1} parent=5 // pred_region
        // Predicated region
        $region21: #{tpu_custom_call.1} parent=19 // pred_check
          %p171 = pneg %p34
        $region22: #{tpu_custom_call.1} parent=19 // pred_check_branch
          %173 = sbr.rel (%p171) target = $region24
        $region23: #{tpu_custom_call.1} parent=19 // pred_region
          %s174 = smul.u32 2, %s14
          %p175 = scmp.lt.s32.totalorder %s174, 3
          %s176 = scalar_select %p175, %s174, 3
          %s177 = smul.addr %s176, 8
          %s178 = scalar_lea.vmem %s0, %s177
          %s179 = smul.u32 2, %s14
        $region24: #{tpu_custom_call.1} parent=19 // pred_fallthru
          _
        // Predicated region
        $region25: #{tpu_custom_call.1} parent=19 // pred_check
          %p180 = pneg %p60
        $region26: #{tpu_custom_call.1} parent=19 // pred_check_branch
          %182 = sbr.rel (%p180) target = $region28
        $region27: #{tpu_custom_call.1} parent=19 // pred_region
          %s183 = smul.u32 2, %s14
          %p184 = scmp.lt.s32.totalorder %s183, 3
          %s185 = scalar_select %p184, %s183, 3
          %s186 = smul.addr %s185, 8
          %s187 = scalar_lea.vmem %s1, %s186
          %s188 = smul.u32 2, %s14
        $region28: #{tpu_custom_call.1} parent=19 // pred_fallthru
          _
        // Predicated region
        $region29: #{tpu_custom_call.1} parent=19 // pred_check
          %p189 = pneg %p86
        $region30: #{tpu_custom_call.1} parent=19 // pred_check_branch
          %191 = sbr.rel (%p189) target = $region32
        $region31: #{tpu_custom_call.1} parent=19 // pred_region
          %s192 = smul.u32 2, %s14
          %p193 = scmp.lt.s32.totalorder %s192, 3
          %s194 = scalar_select %p193, %s192, 3
          %s195 = smul.addr %s194, 8
          %s196 = scalar_lea.vmem %s2, %s195
          %s197 = smul.u32 2, %s14
        $region32: #{tpu_custom_call.1} parent=19 // pred_fallthru
          _
      $region20: #{tpu_custom_call.1} parent=5 // pred_fallthru
        _
      %p198 = scmp.le.s32.totalorder 1, %s14
      %p199 = scmp.lt.s32.totalorder %s14, 3
      %p200 = pnand %p198, %p199
      %p201 = pneg %p200
      // Predicated region
      $region33: #{tpu_custom_call.1} parent=5 // pred_check
        _
      $region34: #{tpu_custom_call.1} parent=5 // pred_check_branch
        %203 = sbr.rel (%p200) target = $region36
      $region35: #{tpu_custom_call.1} parent=5 // pred_region
        %s204 = ssub.s32 %s14, 1
        // Predicated region
        $region37: #{tpu_custom_call.1} parent=35 // pred_check
          %p205 = pneg %p113
        $region38: #{tpu_custom_call.1} parent=35 // pred_check_branch
          %207 = sbr.rel (%p205) target = $region40
        $region39: #{tpu_custom_call.1} parent=35 // pred_region
          %208 = dma.done [#allocation3], 2048
        $region40: #{tpu_custom_call.1} parent=35 // pred_fallthru
          _
        %s209 = smul.u32 2, %s19
        %p210 = scmp.lt.s32.totalorder %s209, 3
        %s211 = scalar_select %p210, %s209, 3
        %s212 = smul.addr %s211, 8
        %s213 = scalar_lea.vmem %s0, %s212
        %p214 = pneg %p40
        %p215 = pneg %p37
        %s216 = smul.u32 2, %s19
        %p217 = scmp.lt.s32.totalorder %s216, 3
        %s218 = scalar_select %p217, %s216, 3
        %s219 = smul.addr %s218, 8
        %s220 = scalar_lea.vmem %s1, %s219
        %p221 = pneg %p66
        %p222 = pneg %p63
        %s223 = smul.u32 2, %s19
        %p224 = scmp.lt.s32.totalorder %s223, 3
        %s225 = scalar_select %p224, %s223, 3
        %s226 = smul.addr %s225, 8
        %s227 = scalar_lea.vmem %s2, %s226
        %p228 = pneg %p92
        %p229 = pneg %p89
        %p230 = pneg %p113
        %p231 = pneg %p110
        %p232 = pneg %p139
        %p233 = pneg %p136
        %s234 = sand.u32 %s126, 1
        %s235 = scalar_lea.sflag [#allocation4], %s234
        %s236 = sand.u32 %s126, 1
        %s237 = smul.addr %s236, 64
        %s238 = scalar_lea.vmem [#allocation5], %s237
        %s239 = smul.u32 2, %s19
        %p240 = scmp.lt.s32.totalorder %s239, 3
        %s241 = scalar_select %p240, %s239, 3
        %s242 = smul.addr %s241, 8
        %s243 = scalar_lea.vmem %s0, %s242
        %s244 = smul.u32 2, %s19
        %s245 = smul.u32 2, %s19
        %p246 = scmp.lt.s32.totalorder %s245, 3
        %s247 = scalar_select %p246, %s245, 3
        %s248 = smul.addr %s247, 8
        %s249 = scalar_lea.vmem %s1, %s248
        %s250 = smul.u32 2, %s19
        %s251 = smul.u32 2, %s19
        %p252 = scmp.lt.s32.totalorder %s251, 3
        %s253 = scalar_select %p252, %s251, 3
        %s254 = smul.addr %s253, 8
        %s255 = scalar_lea.vmem %s2, %s254
        %s256 = smul.u32 2, %s19
        %s257 = smul.u32 2, %s19
        %v258 = vld [vmem:[%s243] sm:$0xff]
        %v259 = vld [vmem:[%s243 + $0x8] sm:$0xff]
        %v260 = vld [vmem:[%s249] sm:$0xff]
        %v261 = vld [vmem:[%s249 + $0x8] sm:$0xff]
        %263 = vset.pattern.permute.xlu0 0
        %264 = vperm.xlu0 %263, %v260
        %v265 = vpop.permute.xlu0 %264
        %268 = vset.pattern.permute.xlu0 0
        %269 = vperm.xlu0 %268, %v261
        %v270 = vpop.permute.xlu0 %269
        %v272 = vmul.f32 %v258, %v265
        %v273 = vmul.f32 %v259, %v270
        %v274 = vld [vmem:[%s255] sm:$0xff]
        %v275 = vld [vmem:[%s255 + $0x8] sm:$0xff]
        %277 = vset.pattern.permute.xlu0 0
        %278 = vperm.xlu0 %277, %v274
        %v279 = vpop.permute.xlu0 %278
        %282 = vset.pattern.permute.xlu0 0
        %283 = vperm.xlu0 %282, %v275
        %v284 = vpop.permute.xlu0 %283
        %v286 = vadd.f32 %v272, %v279
        %v287 = vadd.f32 %v273, %v284
        %vm288 = vcmp.gt.f32.partialorder %v286, 0.0
        %vm289 = vcmp.gt.f32.partialorder %v287, 0.0
        %v290 = vmul.f32 %v286, 0.1
        %v291 = vmul.f32 %v287, 0.1
        %v292 = vsel %vm288, %v286, %v290
        %v293 = vsel %vm289, %v287, %v291
        %v294 = vld [vmem:[#allocation2] sm:$0xff]
        %v295 = vld [vmem:[#allocation2 + $0x8] sm:$0xff]
        %v296 = vld [vmem:[#allocation2 + $0x10] sm:$0xff]
        %v297 = vld [vmem:[#allocation2 + $0x18] sm:$0xff]
        %v298 = vld [vmem:[#allocation2 + $0x20] sm:$0xff]
        %v299 = vld [vmem:[#allocation2 + $0x28] sm:$0xff]
        %v300 = vld [vmem:[#allocation2 + $0x30] sm:$0xff]
        %v301 = vld [vmem:[#allocation2 + $0x38] sm:$0xff]
        %v302 = vld [vmem:[#allocation2 + $0x40] sm:$0xff]
        %v303 = vld [vmem:[#allocation2 + $0x48] sm:$0xff]
        %v304 = vld [vmem:[#allocation2 + $0x50] sm:$0xff]
        %v305 = vld [vmem:[#allocation2 + $0x58] sm:$0xff]
        %v306 = vld [vmem:[#allocation2 + $0x60] sm:$0xff]
        %v307 = vld [vmem:[#allocation2 + $0x68] sm:$0xff]
        %v308 = vld [vmem:[#allocation2 + $0x70] sm:$0xff]
        %v309 = vld [vmem:[#allocation2 + $0x78] sm:$0xff]
        %vm310 = vcmask 523264
        %v312 = vsel %vm310, %v292, 0
        %v315 = vsel %vm310, %v293, 0
        %v317 = vand.u32 %v295, 4294901760
        %318 = vmatprep.subr.mxu0 %v317
        %v319 = vand.u32 %v294, 4294901760
        %320 = vmatpush1.msra.mxu0 %v319
        %v321 = vand.u32 %v297, 4294901760
        %322 = vmatprep.subr.mxu0 %v321
        %v323 = vand.u32 %v296, 4294901760
        %324 = vmatpush1.msra.mxu0 %v323
        %v325 = vand.u32 %v299, 4294901760
        %326 = vmatprep.subr.mxu0 %v325
        %v327 = vand.u32 %v298, 4294901760
        %328 = vmatpush1.msra.mxu0 %v327
        %v329 = vand.u32 %v301, 4294901760
        %330 = vmatprep.subr.mxu0 %v329
        %v331 = vand.u32 %v300, 4294901760
        %332 = vmatpush1.msra.mxu0 %v331
        %v333 = vand.u32 %v303, 4294901760
        %334 = vmatprep.subr.mxu0 %v333
        %v335 = vand.u32 %v302, 4294901760
        %336 = vmatpush1.msra.mxu0 %v335
        %v337 = vand.u32 %v305, 4294901760
        %338 = vmatprep.subr.mxu0 %v337
        %v339 = vand.u32 %v304, 4294901760
        %340 = vmatpush1.msra.mxu0 %v339
        %v341 = vand.u32 %v307, 4294901760
        %342 = vmatprep.subr.mxu0 %v341
        %v343 = vand.u32 %v306, 4294901760
        %344 = vmatpush1.msra.mxu0 %v343
        %v345 = vand.u32 %v309, 4294901760
        %346 = vmatprep.subr.mxu0 %v345
        %v347 = vand.u32 %v308, 4294901760
        %348 = vmatpush1.msra.mxu0 %v347
        %349 = vmatprep.subr.mxu0 0.0
        %350 = vmatpush1.msra.mxu0 0.0
        %351 = vmatprep.subr.mxu0 0.0
        %352 = vmatpush1.msra.mxu0 0.0
        %353 = vmatprep.subr.mxu0 0.0
        %354 = vmatpush1.msra.mxu0 0.0
        %355 = vmatprep.subr.mxu0 0.0
        %356 = vmatpush1.msra.mxu0 0.0
        %357 = vmatprep.subr.mxu0 0.0
        %358 = vmatpush1.msra.mxu0 0.0
        %359 = vmatprep.subr.mxu0 0.0
        %360 = vmatpush1.msra.mxu0 0.0
        %361 = vmatprep.subr.mxu0 0.0
        %362 = vmatpush1.msra.mxu0 0.0
        %363 = vmatprep.subr.mxu0 0.0
        %364 = vmatpush1.msra.mxu0 0.0
        %365 = vmatprep.subr.mxu0 0.0
        %366 = vmatpush1.msra.mxu0 0.0
        %367 = vmatprep.subr.mxu0 0.0
        %368 = vmatpush1.msra.mxu0 0.0
        %369 = vmatprep.subr.mxu0 0.0
        %370 = vmatpush1.msra.mxu0 0.0
        %371 = vmatprep.subr.mxu0 0.0
        %372 = vmatpush1.msra.mxu0 0.0
        %373 = vmatprep.subr.mxu0 0.0
        %374 = vmatpush1.msra.mxu0 0.0
        %375 = vmatprep.subr.mxu0 0.0
        %376 = vmatpush1.msra.mxu0 0.0
        %377 = vmatprep.subr.mxu0 0.0
        %378 = vmatpush1.msra.mxu0 0.0
        %379 = vmatprep.subr.mxu0 0.0
        %380 = vmatpush1.msra.mxu0 0.0
        %381 = vmatprep.subr.mxu0 0.0
        %382 = vmatpush1.msra.mxu0 0.0
        %383 = vmatprep.subr.mxu0 0.0
        %384 = vmatpush1.msra.mxu0 0.0
        %385 = vmatprep.subr.mxu0 0.0
        %386 = vmatpush1.msra.mxu0 0.0
        %387 = vmatprep.subr.mxu0 0.0
        %388 = vmatpush1.msra.mxu0 0.0
        %389 = vmatprep.subr.mxu0 0.0
        %390 = vmatpush1.msra.mxu0 0.0
        %391 = vmatprep.subr.mxu0 0.0
        %392 = vmatpush1.msra.mxu0 0.0
        %393 = vmatprep.subr.mxu0 0.0
        %394 = vmatpush1.msra.mxu0 0.0
        %395 = vmatprep.subr.mxu0 0.0
        %396 = vmatpush1.msra.mxu0 0.0
        %397 = vmatprep.mubr.f32.mxu0 0.0
        %v398 = vand.u32 %v312, 4294901760
        %v399 = vsub.f32 %v312, %v398
        %v400 = vand.u32 %v399, 4294901760
        %v401 = vsub.f32 %v399, %v400
        %v402 = vand.u32 %v401, 4294901760
        %403 = vmatmul.mubr.f32.gmra.mrb[0].mxu0 %v402
        %v404 = vpop.f32.mrb[0].mxu0
        %v405 = vadd.f32 0.0, %v404
        %v406 = vpop.f32.mrb[0].mxu0
        %v407 = vadd.f32 0.0, %v406
        %408 = vmatprep.mubr.f32.mxu0 0.0
        %v409 = vand.u32 %v315, 4294901760
        %v410 = vsub.f32 %v315, %v409
        %v411 = vand.u32 %v410, 4294901760
        %v412 = vsub.f32 %v410, %v411
        %v413 = vand.u32 %v412, 4294901760
        %414 = vmatmul.mubr.f32.gmra.mrb[0].mxu0 %v413
        %v415 = vpop.f32.mrb[0].mxu0
        %v416 = vadd.f32 0.0, %v415
        %v417 = vpop.f32.mrb[0].mxu0
        %v418 = vadd.f32 0.0, %v417
        %419 = vdwg.mxu0
        %v420 = vand.u32 %v295, 4294901760
        %v421 = vsub.f32 %v295, %v420
        %v422 = vand.u32 %v421, 4294901760
        %v423 = vsub.f32 %v421, %v422
        %v424 = vand.u32 %v423, 4294901760
        %425 = vmatprep.subr.mxu0 %v424
        %v426 = vand.u32 %v294, 4294901760
        %v427 = vsub.f32 %v294, %v426
        %v428 = vand.u32 %v427, 4294901760
        %v429 = vsub.f32 %v427, %v428
        %v430 = vand.u32 %v429, 4294901760
        %431 = vmatpush1.msra.mxu0 %v430
        %v432 = vand.u32 %v297, 4294901760
        %v433 = vsub.f32 %v297, %v432
        %v434 = vand.u32 %v433, 4294901760
        %v435 = vsub.f32 %v433, %v434
        %v436 = vand.u32 %v435, 4294901760
        %437 = vmatprep.subr.mxu0 %v436
        %v438 = vand.u32 %v296, 4294901760
        %v439 = vsub.f32 %v296, %v438
        %v440 = vand.u32 %v439, 4294901760
        %v441 = vsub.f32 %v439, %v440
        %v442 = vand.u32 %v441, 4294901760
        %443 = vmatpush1.msra.mxu0 %v442
        %v444 = vand.u32 %v299, 4294901760
        %v445 = vsub.f32 %v299, %v444
        %v446 = vand.u32 %v445, 4294901760
        %v447 = vsub.f32 %v445, %v446
        %v448 = vand.u32 %v447, 4294901760
        %449 = vmatprep.subr.mxu0 %v448
        %v450 = vand.u32 %v298, 4294901760
        %v451 = vsub.f32 %v298, %v450
        %v452 = vand.u32 %v451, 4294901760
        %v453 = vsub.f32 %v451, %v452
        %v454 = vand.u32 %v453, 4294901760
        %455 = vmatpush1.msra.mxu0 %v454
        %v456 = vand.u32 %v301, 4294901760
        %v457 = vsub.f32 %v301, %v456
        %v458 = vand.u32 %v457, 4294901760
        %v459 = vsub.f32 %v457, %v458
        %v460 = vand.u32 %v459, 4294901760
        %461 = vmatprep.subr.mxu0 %v460
        %v462 = vand.u32 %v300, 4294901760
        %v463 = vsub.f32 %v300, %v462
        %v464 = vand.u32 %v463, 4294901760
        %v465 = vsub.f32 %v463, %v464
        %v466 = vand.u32 %v465, 4294901760
        %467 = vmatpush1.msra.mxu0 %v466
        %v468 = vand.u32 %v303, 4294901760
        %v469 = vsub.f32 %v303, %v468
        %v470 = vand.u32 %v469, 4294901760
        %v471 = vsub.f32 %v469, %v470
        %v472 = vand.u32 %v471, 4294901760
        %473 = vmatprep.subr.mxu0 %v472
        %v474 = vand.u32 %v302, 4294901760
        %v475 = vsub.f32 %v302, %v474
        %v476 = vand.u32 %v475, 4294901760
        %v477 = vsub.f32 %v475, %v476
        %v478 = vand.u32 %v477, 4294901760
        %479 = vmatpush1.msra.mxu0 %v478
        %v480 = vand.u32 %v305, 4294901760
        %v481 = vsub.f32 %v305, %v480
        %v482 = vand.u32 %v481, 4294901760
        %v483 = vsub.f32 %v481, %v482
        %v484 = vand.u32 %v483, 4294901760
        %485 = vmatprep.subr.mxu0 %v484
        %v486 = vand.u32 %v304, 4294901760
        %v487 = vsub.f32 %v304, %v486
        %v488 = vand.u32 %v487, 4294901760
        %v489 = vsub.f32 %v487, %v488
        %v490 = vand.u32 %v489, 4294901760
        %491 = vmatpush1.msra.mxu0 %v490
        %v492 = vand.u32 %v307, 4294901760
        %v493 = vsub.f32 %v307, %v492
        %v494 = vand.u32 %v493, 4294901760
        %v495 = vsub.f32 %v493, %v494
        %v496 = vand.u32 %v495, 4294901760
        %497 = vmatprep.subr.mxu0 %v496
        %v498 = vand.u32 %v306, 4294901760
        %v499 = vsub.f32 %v306, %v498
        %v500 = vand.u32 %v499, 4294901760
        %v501 = vsub.f32 %v499, %v500
        %v502 = vand.u32 %v501, 4294901760
        %503 = vmatpush1.msra.mxu0 %v502
        %v504 = vand.u32 %v309, 4294901760
        %v505 = vsub.f32 %v309, %v504
        %v506 = vand.u32 %v505, 4294901760
        %v507 = vsub.f32 %v505, %v506
        %v508 = vand.u32 %v507, 4294901760
        %509 = vmatprep.subr.mxu0 %v508
        %v510 = vand.u32 %v308, 4294901760
        %v511 = vsub.f32 %v308, %v510
        %v512 = vand.u32 %v511, 4294901760
        %v513 = vsub.f32 %v511, %v512
        %v514 = vand.u32 %v513, 4294901760
        %515 = vmatpush1.msra.mxu0 %v514
        %516 = vmatprep.subr.mxu0 0.0
        %517 = vmatpush1.msra.mxu0 0.0
        %518 = vmatprep.subr.mxu0 0.0
        %519 = vmatpush1.msra.mxu0 0.0
        %520 = vmatprep.subr.mxu0 0.0
        %521 = vmatpush1.msra.mxu0 0.0
        %522 = vmatprep.subr.mxu0 0.0
        %523 = vmatpush1.msra.mxu0 0.0
        %524 = vmatprep.subr.mxu0 0.0
        %525 = vmatpush1.msra.mxu0 0.0
        %526 = vmatprep.subr.mxu0 0.0
        %527 = vmatpush1.msra.mxu0 0.0
        %528 = vmatprep.subr.mxu0 0.0
        %529 = vmatpush1.msra.mxu0 0.0
        %530 = vmatprep.subr.mxu0 0.0
        %531 = vmatpush1.msra.mxu0 0.0
        %532 = vmatprep.subr.mxu0 0.0
        %533 = vmatpush1.msra.mxu0 0.0
        %534 = vmatprep.subr.mxu0 0.0
        %535 = vmatpush1.msra.mxu0 0.0
        %536 = vmatprep.subr.mxu0 0.0
        %537 = vmatpush1.msra.mxu0 0.0
        %538 = vmatprep.subr.mxu0 0.0
        %539 = vmatpush1.msra.mxu0 0.0
        %540 = vmatprep.subr.mxu0 0.0
        %541 = vmatpush1.msra.mxu0 0.0
        %542 = vmatprep.subr.mxu0 0.0
        %543 = vmatpush1.msra.mxu0 0.0
        %544 = vmatprep.subr.mxu0 0.0
        %545 = vmatpush1.msra.mxu0 0.0
        %546 = vmatprep.subr.mxu0 0.0
        %547 = vmatpush1.msra.mxu0 0.0
        %548 = vmatprep.subr.mxu0 0.0
        %549 = vmatpush1.msra.mxu0 0.0
        %550 = vmatprep.subr.mxu0 0.0
        %551 = vmatpush1.msra.mxu0 0.0
        %552 = vmatprep.subr.mxu0 0.0
        %553 = vmatpush1.msra.mxu0 0.0
        %554 = vmatprep.subr.mxu0 0.0
        %555 = vmatpush1.msra.mxu0 0.0
        %556 = vmatprep.subr.mxu0 0.0
        %557 = vmatpush1.msra.mxu0 0.0
        %558 = vmatprep.subr.mxu0 0.0
        %559 = vmatpush1.msra.mxu0 0.0
        %560 = vmatprep.subr.mxu0 0.0
        %561 = vmatpush1.msra.mxu0 0.0
        %562 = vmatprep.subr.mxu0 0.0
        %563 = vmatpush1.msra.mxu0 0.0
        %564 = vmatprep.mubr.f32.mxu0 0.0
        %v565 = vand.u32 %v312, 4294901760
        %566 = vmatmul.mubr.f32.gmra.mrb[0].mxu0 %v565
        %v567 = vpop.f32.mrb[0].mxu0
        %v568 = vadd.f32 %v405, %v567
        %v569 = vpop.f32.mrb[0].mxu0
        %v570 = vadd.f32 %v407, %v569
        %571 = vmatprep.mubr.f32.mxu0 0.0
        %v572 = vand.u32 %v315, 4294901760
        %573 = vmatmul.mubr.f32.gmra.mrb[0].mxu0 %v572
        %v574 = vpop.f32.mrb[0].mxu0
        %v575 = vadd.f32 %v416, %v574
        %v576 = vpop.f32.mrb[0].mxu0
        %v577 = vadd.f32 %v418, %v576
        %578 = vdwg.mxu0
        %v579 = vand.u32 %v295, 4294901760
        %v580 = vsub.f32 %v295, %v579
        %581 = vmatprep.subr.mxu0 %v580
        %v582 = vand.u32 %v294, 4294901760
        %v583 = vsub.f32 %v294, %v582
        %584 = vmatpush1.msra.mxu0 %v583
        %v585 = vand.u32 %v297, 4294901760
        %v586 = vsub.f32 %v297, %v585
        %587 = vmatprep.subr.mxu0 %v586
        %v588 = vand.u32 %v296, 4294901760
        %v589 = vsub.f32 %v296, %v588
        %590 = vmatpush1.msra.mxu0 %v589
        %v591 = vand.u32 %v299, 4294901760
        %v592 = vsub.f32 %v299, %v591
        %593 = vmatprep.subr.mxu0 %v592
        %v594 = vand.u32 %v298, 4294901760
        %v595 = vsub.f32 %v298, %v594
        %596 = vmatpush1.msra.mxu0 %v595
        %v597 = vand.u32 %v301, 4294901760
        %v598 = vsub.f32 %v301, %v597
        %599 = vmatprep.subr.mxu0 %v598
        %v600 = vand.u32 %v300, 4294901760
        %v601 = vsub.f32 %v300, %v600
        %602 = vmatpush1.msra.mxu0 %v601
        %v603 = vand.u32 %v303, 4294901760
        %v604 = vsub.f32 %v303, %v603
        %605 = vmatprep.subr.mxu0 %v604
        %v606 = vand.u32 %v302, 4294901760
        %v607 = vsub.f32 %v302, %v606
        %608 = vmatpush1.msra.mxu0 %v607
        %v609 = vand.u32 %v305, 4294901760
        %v610 = vsub.f32 %v305, %v609
        %611 = vmatprep.subr.mxu0 %v610
        %v612 = vand.u32 %v304, 4294901760
        %v613 = vsub.f32 %v304, %v612
        %614 = vmatpush1.msra.mxu0 %v613
        %v615 = vand.u32 %v307, 4294901760
        %v616 = vsub.f32 %v307, %v615
        %617 = vmatprep.subr.mxu0 %v616
        %v618 = vand.u32 %v306, 4294901760
        %v619 = vsub.f32 %v306, %v618
        %620 = vmatpush1.msra.mxu0 %v619
        %v621 = vand.u32 %v309, 4294901760
        %v622 = vsub.f32 %v309, %v621
        %623 = vmatprep.subr.mxu0 %v622
        %v624 = vand.u32 %v308, 4294901760
        %v625 = vsub.f32 %v308, %v624
        %626 = vmatpush1.msra.mxu0 %v625
        %627 = vmatprep.subr.mxu0 0.0
        %628 = vmatpush1.msra.mxu0 0.0
        %629 = vmatprep.subr.mxu0 0.0
        %630 = vmatpush1.msra.mxu0 0.0
        %631 = vmatprep.subr.mxu0 0.0
        %632 = vmatpush1.msra.mxu0 0.0
        %633 = vmatprep.subr.mxu0 0.0
        %634 = vmatpush1.msra.mxu0 0.0
        %635 = vmatprep.subr.mxu0 0.0
        %636 = vmatpush1.msra.mxu0 0.0
        %637 = vmatprep.subr.mxu0 0.0
        %638 = vmatpush1.msra.mxu0 0.0
        %639 = vmatprep.subr.mxu0 0.0
        %640 = vmatpush1.msra.mxu0 0.0
        %641 = vmatprep.subr.mxu0 0.0
        %642 = vmatpush1.msra.mxu0 0.0
        %643 = vmatprep.subr.mxu0 0.0
        %644 = vmatpush1.msra.mxu0 0.0
        %645 = vmatprep.subr.mxu0 0.0
        %646 = vmatpush1.msra.mxu0 0.0
        %647 = vmatprep.subr.mxu0 0.0
        %648 = vmatpush1.msra.mxu0 0.0
        %649 = vmatprep.subr.mxu0 0.0
        %650 = vmatpush1.msra.mxu0 0.0
        %651 = vmatprep.subr.mxu0 0.0
        %652 = vmatpush1.msra.mxu0 0.0
        %653 = vmatprep.subr.mxu0 0.0
        %654 = vmatpush1.msra.mxu0 0.0
        %655 = vmatprep.subr.mxu0 0.0
        %656 = vmatpush1.msra.mxu0 0.0
        %657 = vmatprep.subr.mxu0 0.0
        %658 = vmatpush1.msra.mxu0 0.0
        %659 = vmatprep.subr.mxu0 0.0
        %660 = vmatpush1.msra.mxu0 0.0
        %661 = vmatprep.subr.mxu0 0.0
        %662 = vmatpush1.msra.mxu0 0.0
        %663 = vmatprep.subr.mxu0 0.0
        %664 = vmatpush1.msra.mxu0 0.0
        %665 = vmatprep.subr.mxu0 0.0
        %666 = vmatpush1.msra.mxu0 0.0
        %667 = vmatprep.subr.mxu0 0.0
        %668 = vmatpush1.msra.mxu0 0.0
        %669 = vmatprep.subr.mxu0 0.0
        %670 = vmatpush1.msra.mxu0 0.0
        %671 = vmatprep.subr.mxu0 0.0
        %672 = vmatpush1.msra.mxu0 0.0
        %673 = vmatprep.subr.mxu0 0.0
        %674 = vmatpush1.msra.mxu0 0.0
        %675 = vmatprep.mubr.f32.mxu0 0.0
        %v676 = vand.u32 %v312, 4294901760
        %v677 = vsub.f32 %v312, %v676
        %678 = vmatmul.mubr.f32.gmra.mrb[0].mxu0 %v677
        %v679 = vpop.f32.mrb[0].mxu0
        %v680 = vadd.f32 %v568, %v679
        %v681 = vpop.f32.mrb[0].mxu0
        %v682 = vadd.f32 %v570, %v681
        %683 = vmatprep.mubr.f32.mxu0 0.0
        %v684 = vand.u32 %v315, 4294901760
        %v685 = vsub.f32 %v315, %v684
        %686 = vmatmul.mubr.f32.gmra.mrb[0].mxu0 %v685
        %v687 = vpop.f32.mrb[0].mxu0
        %v688 = vadd.f32 %v575, %v687
        %v689 = vpop.f32.mrb[0].mxu0
        %v690 = vadd.f32 %v577, %v689
        %691 = vdwg.mxu0
        %v692 = vand.u32 %v295, 4294901760
        %693 = vmatprep.subr.mxu0 %v692
        %v694 = vand.u32 %v294, 4294901760
        %695 = vmatpush1.msra.mxu0 %v694
        %v696 = vand.u32 %v297, 4294901760
        %697 = vmatprep.subr.mxu0 %v696
        %v698 = vand.u32 %v296, 4294901760
        %699 = vmatpush1.msra.mxu0 %v698
        %v700 = vand.u32 %v299, 4294901760
        %701 = vmatprep.subr.mxu0 %v700
        %v702 = vand.u32 %v298, 4294901760
        %703 = vmatpush1.msra.mxu0 %v702
        %v704 = vand.u32 %v301, 4294901760
        %705 = vmatprep.subr.mxu0 %v704
        %v706 = vand.u32 %v300, 4294901760
        %707 = vmatpush1.msra.mxu0 %v706
        %v708 = vand.u32 %v303, 4294901760
        %709 = vmatprep.subr.mxu0 %v708
        %v710 = vand.u32 %v302, 4294901760
        %711 = vmatpush1.msra.mxu0 %v710
        %v712 = vand.u32 %v305, 4294901760
        %713 = vmatprep.subr.mxu0 %v712
        %v714 = vand.u32 %v304, 4294901760
        %715 = vmatpush1.msra.mxu0 %v714
        %v716 = vand.u32 %v307, 4294901760
        %717 = vmatprep.subr.mxu0 %v716
        %v718 = vand.u32 %v306, 4294901760
        %719 = vmatpush1.msra.mxu0 %v718
        %v720 = vand.u32 %v309, 4294901760
        %721 = vmatprep.subr.mxu0 %v720
        %v722 = vand.u32 %v308, 4294901760
        %723 = vmatpush1.msra.mxu0 %v722
        %724 = vmatprep.subr.mxu0 0.0
        %725 = vmatpush1.msra.mxu0 0.0
        %726 = vmatprep.subr.mxu0 0.0
        %727 = vmatpush1.msra.mxu0 0.0
        %728 = vmatprep.subr.mxu0 0.0
        %729 = vmatpush1.msra.mxu0 0.0
        %730 = vmatprep.subr.mxu0 0.0
        %731 = vmatpush1.msra.mxu0 0.0
        %732 = vmatprep.subr.mxu0 0.0
        %733 = vmatpush1.msra.mxu0 0.0
        %734 = vmatprep.subr.mxu0 0.0
        %735 = vmatpush1.msra.mxu0 0.0
        %736 = vmatprep.subr.mxu0 0.0
        %737 = vmatpush1.msra.mxu0 0.0
        %738 = vmatprep.subr.mxu0 0.0
        %739 = vmatpush1.msra.mxu0 0.0
        %740 = vmatprep.subr.mxu0 0.0
        %741 = vmatpush1.msra.mxu0 0.0
        %742 = vmatprep.subr.mxu0 0.0
        %743 = vmatpush1.msra.mxu0 0.0
        %744 = vmatprep.subr.mxu0 0.0
        %745 = vmatpush1.msra.mxu0 0.0
        %746 = vmatprep.subr.mxu0 0.0
        %747 = vmatpush1.msra.mxu0 0.0
        %748 = vmatprep.subr.mxu0 0.0
        %749 = vmatpush1.msra.mxu0 0.0
        %750 = vmatprep.subr.mxu0 0.0
        %751 = vmatpush1.msra.mxu0 0.0
        %752 = vmatprep.subr.mxu0 0.0
        %753 = vmatpush1.msra.mxu0 0.0
        %754 = vmatprep.subr.mxu0 0.0
        %755 = vmatpush1.msra.mxu0 0.0
        %756 = vmatprep.subr.mxu0 0.0
        %757 = vmatpush1.msra.mxu0 0.0
        %758 = vmatprep.subr.mxu0 0.0
        %759 = vmatpush1.msra.mxu0 0.0
        %760 = vmatprep.subr.mxu0 0.0
        %761 = vmatpush1.msra.mxu0 0.0
        %762 = vmatprep.subr.mxu0 0.0
        %763 = vmatpush1.msra.mxu0 0.0
        %764 = vmatprep.subr.mxu0 0.0
        %765 = vmatpush1.msra.mxu0 0.0
        %766 = vmatprep.subr.mxu0 0.0
        %767 = vmatpush1.msra.mxu0 0.0
        %768 = vmatprep.subr.mxu0 0.0
        %769 = vmatpush1.msra.mxu0 0.0
        %770 = vmatprep.subr.mxu0 0.0
        %771 = vmatpush1.msra.mxu0 0.0
        %772 = vmatprep.mubr.f32.mxu0 0.0
        %v773 = vand.u32 %v312, 4294901760
        %v774 = vsub.f32 %v312, %v773
        %v775 = vand.u32 %v774, 4294901760
        %776 = vmatmul.mubr.f32.gmra.mrb[0].mxu0 %v775
        %v777 = vpop.f32.mrb[0].mxu0
        %v778 = vadd.f32 %v680, %v777
        %v779 = vpop.f32.mrb[0].mxu0
        %v780 = vadd.f32 %v682, %v779
        %781 = vmatprep.mubr.f32.mxu0 0.0
        %v782 = vand.u32 %v315, 4294901760
        %v783 = vsub.f32 %v315, %v782
        %v784 = vand.u32 %v783, 4294901760
        %785 = vmatmul.mubr.f32.gmra.mrb[0].mxu0 %v784
        %v786 = vpop.f32.mrb[0].mxu0
        %v787 = vadd.f32 %v688, %v786
        %v788 = vpop.f32.mrb[0].mxu0
        %v789 = vadd.f32 %v690, %v788
        %790 = vdwg.mxu0
        %v791 = vand.u32 %v295, 4294901760
        %v792 = vsub.f32 %v295, %v791
        %v793 = vand.u32 %v792, 4294901760
        %794 = vmatprep.subr.mxu0 %v793
        %v795 = vand.u32 %v294, 4294901760
        %v796 = vsub.f32 %v294, %v795
        %v797 = vand.u32 %v796, 4294901760
        %798 = vmatpush1.msra.mxu0 %v797
        %v799 = vand.u32 %v297, 4294901760
        %v800 = vsub.f32 %v297, %v799
        %v801 = vand.u32 %v800, 4294901760
        %802 = vmatprep.subr.mxu0 %v801
        %v803 = vand.u32 %v296, 4294901760
        %v804 = vsub.f32 %v296, %v803
        %v805 = vand.u32 %v804, 4294901760
        %806 = vmatpush1.msra.mxu0 %v805
        %v807 = vand.u32 %v299, 4294901760
        %v808 = vsub.f32 %v299, %v807
        %v809 = vand.u32 %v808, 4294901760
        %810 = vmatprep.subr.mxu0 %v809
        %v811 = vand.u32 %v298, 4294901760
        %v812 = vsub.f32 %v298, %v811
        %v813 = vand.u32 %v812, 4294901760
        %814 = vmatpush1.msra.mxu0 %v813
        %v815 = vand.u32 %v301, 4294901760
        %v816 = vsub.f32 %v301, %v815
        %v817 = vand.u32 %v816, 4294901760
        %818 = vmatprep.subr.mxu0 %v817
        %v819 = vand.u32 %v300, 4294901760
        %v820 = vsub.f32 %v300, %v819
        %v821 = vand.u32 %v820, 4294901760
        %822 = vmatpush1.msra.mxu0 %v821
        %v823 = vand.u32 %v303, 4294901760
        %v824 = vsub.f32 %v303, %v823
        %v825 = vand.u32 %v824, 4294901760
        %826 = vmatprep.subr.mxu0 %v825
        %v827 = vand.u32 %v302, 4294901760
        %v828 = vsub.f32 %v302, %v827
        %v829 = vand.u32 %v828, 4294901760
        %830 = vmatpush1.msra.mxu0 %v829
        %v831 = vand.u32 %v305, 4294901760
        %v832 = vsub.f32 %v305, %v831
        %v833 = vand.u32 %v832, 4294901760
        %834 = vmatprep.subr.mxu0 %v833
        %v835 = vand.u32 %v304, 4294901760
        %v836 = vsub.f32 %v304, %v835
        %v837 = vand.u32 %v836, 4294901760
        %838 = vmatpush1.msra.mxu0 %v837
        %v839 = vand.u32 %v307, 4294901760
        %v840 = vsub.f32 %v307, %v839
        %v841 = vand.u32 %v840, 4294901760
        %842 = vmatprep.subr.mxu0 %v841
        %v843 = vand.u32 %v306, 4294901760
        %v844 = vsub.f32 %v306, %v843
        %v845 = vand.u32 %v844, 4294901760
        %846 = vmatpush1.msra.mxu0 %v845
        %v847 = vand.u32 %v309, 4294901760
        %v848 = vsub.f32 %v309, %v847
        %v849 = vand.u32 %v848, 4294901760
        %850 = vmatprep.subr.mxu0 %v849
        %v851 = vand.u32 %v308, 4294901760
        %v852 = vsub.f32 %v308, %v851
        %v853 = vand.u32 %v852, 4294901760
        %854 = vmatpush1.msra.mxu0 %v853
        %855 = vmatprep.subr.mxu0 0.0
        %856 = vmatpush1.msra.mxu0 0.0
        %857 = vmatprep.subr.mxu0 0.0
        %858 = vmatpush1.msra.mxu0 0.0
        %859 = vmatprep.subr.mxu0 0.0
        %860 = vmatpush1.msra.mxu0 0.0
        %861 = vmatprep.subr.mxu0 0.0
        %862 = vmatpush1.msra.mxu0 0.0
        %863 = vmatprep.subr.mxu0 0.0
        %864 = vmatpush1.msra.mxu0 0.0
        %865 = vmatprep.subr.mxu0 0.0
        %866 = vmatpush1.msra.mxu0 0.0
        %867 = vmatprep.subr.mxu0 0.0
        %868 = vmatpush1.msra.mxu0 0.0
        %869 = vmatprep.subr.mxu0 0.0
        %870 = vmatpush1.msra.mxu0 0.0
        %871 = vmatprep.subr.mxu0 0.0
        %872 = vmatpush1.msra.mxu0 0.0
        %873 = vmatprep.subr.mxu0 0.0
        %874 = vmatpush1.msra.mxu0 0.0
        %875 = vmatprep.subr.mxu0 0.0
        %876 = vmatpush1.msra.mxu0 0.0
        %877 = vmatprep.subr.mxu0 0.0
        %878 = vmatpush1.msra.mxu0 0.0
        %879 = vmatprep.subr.mxu0 0.0
        %880 = vmatpush1.msra.mxu0 0.0
        %881 = vmatprep.subr.mxu0 0.0
        %882 = vmatpush1.msra.mxu0 0.0
        %883 = vmatprep.subr.mxu0 0.0
        %884 = vmatpush1.msra.mxu0 0.0
        %885 = vmatprep.subr.mxu0 0.0
        %886 = vmatpush1.msra.mxu0 0.0
        %887 = vmatprep.subr.mxu0 0.0
        %888 = vmatpush1.msra.mxu0 0.0
        %889 = vmatprep.subr.mxu0 0.0
        %890 = vmatpush1.msra.mxu0 0.0
        %891 = vmatprep.subr.mxu0 0.0
        %892 = vmatpush1.msra.mxu0 0.0
        %893 = vmatprep.subr.mxu0 0.0
        %894 = vmatpush1.msra.mxu0 0.0
        %895 = vmatprep.subr.mxu0 0.0
        %896 = vmatpush1.msra.mxu0 0.0
        %897 = vmatprep.subr.mxu0 0.0
        %898 = vmatpush1.msra.mxu0 0.0
        %899 = vmatprep.subr.mxu0 0.0
        %900 = vmatpush1.msra.mxu0 0.0
        %901 = vmatprep.subr.mxu0 0.0
        %902 = vmatpush1.msra.mxu0 0.0
        %903 = vmatprep.mubr.f32.mxu0 0.0
        %v904 = vand.u32 %v312, 4294901760
        %905 = vmatmul.mubr.f32.gmra.mrb[0].mxu0 %v904
        %v906 = vpop.f32.mrb[0].mxu0
        %v907 = vadd.f32 %v778, %v906
        %v908 = vpop.f32.mrb[0].mxu0
        %v909 = vadd.f32 %v780, %v908
        %910 = vmatprep.mubr.f32.mxu0 0.0
        %v911 = vand.u32 %v315, 4294901760
        %912 = vmatmul.mubr.f32.gmra.mrb[0].mxu0 %v911
        %v913 = vpop.f32.mrb[0].mxu0
        %v914 = vadd.f32 %v787, %v913
        %v915 = vpop.f32.mrb[0].mxu0
        %v916 = vadd.f32 %v789, %v915
        %917 = vdwg.mxu0
        %v918 = vand.u32 %v295, 4294901760
        %919 = vmatprep.subr.mxu0 %v918
        %v920 = vand.u32 %v294, 4294901760
        %921 = vmatpush1.msra.mxu0 %v920
        %v922 = vand.u32 %v297, 4294901760
        %923 = vmatprep.subr.mxu0 %v922
        %v924 = vand.u32 %v296, 4294901760
        %925 = vmatpush1.msra.mxu0 %v924
        %v926 = vand.u32 %v299, 4294901760
        %927 = vmatprep.subr.mxu0 %v926
        %v928 = vand.u32 %v298, 4294901760
        %929 = vmatpush1.msra.mxu0 %v928
        %v930 = vand.u32 %v301, 4294901760
        %931 = vmatprep.subr.mxu0 %v930
        %v932 = vand.u32 %v300, 4294901760
        %933 = vmatpush1.msra.mxu0 %v932
        %v934 = vand.u32 %v303, 4294901760
        %935 = vmatprep.subr.mxu0 %v934
        %v936 = vand.u32 %v302, 4294901760
        %937 = vmatpush1.msra.mxu0 %v936
        %v938 = vand.u32 %v305, 4294901760
        %939 = vmatprep.subr.mxu0 %v938
        %v940 = vand.u32 %v304, 4294901760
        %941 = vmatpush1.msra.mxu0 %v940
        %v942 = vand.u32 %v307, 4294901760
        %943 = vmatprep.subr.mxu0 %v942
        %v944 = vand.u32 %v306, 4294901760
        %945 = vmatpush1.msra.mxu0 %v944
        %v946 = vand.u32 %v309, 4294901760
        %947 = vmatprep.subr.mxu0 %v946
        %v948 = vand.u32 %v308, 4294901760
        %949 = vmatpush1.msra.mxu0 %v948
        %950 = vmatprep.subr.mxu0 0.0
        %951 = vmatpush1.msra.mxu0 0.0
        %952 = vmatprep.subr.mxu0 0.0
        %953 = vmatpush1.msra.mxu0 0.0
        %954 = vmatprep.subr.mxu0 0.0
        %955 = vmatpush1.msra.mxu0 0.0
        %956 = vmatprep.subr.mxu0 0.0
        %957 = vmatpush1.msra.mxu0 0.0
        %958 = vmatprep.subr.mxu0 0.0
        %959 = vmatpush1.msra.mxu0 0.0
        %960 = vmatprep.subr.mxu0 0.0
        %961 = vmatpush1.msra.mxu0 0.0
        %962 = vmatprep.subr.mxu0 0.0
        %963 = vmatpush1.msra.mxu0 0.0
        %964 = vmatprep.subr.mxu0 0.0
        %965 = vmatpush1.msra.mxu0 0.0
        %966 = vmatprep.subr.mxu0 0.0
        %967 = vmatpush1.msra.mxu0 0.0
        %968 = vmatprep.subr.mxu0 0.0
        %969 = vmatpush1.msra.mxu0 0.0
        %970 = vmatprep.subr.mxu0 0.0
        %971 = vmatpush1.msra.mxu0 0.0
        %972 = vmatprep.subr.mxu0 0.0
        %973 = vmatpush1.msra.mxu0 0.0
        %974 = vmatprep.subr.mxu0 0.0
        %975 = vmatpush1.msra.mxu0 0.0
        %976 = vmatprep.subr.mxu0 0.0
        %977 = vmatpush1.msra.mxu0 0.0
        %978 = vmatprep.subr.mxu0 0.0
        %979 = vmatpush1.msra.mxu0 0.0
        %980 = vmatprep.subr.mxu0 0.0
        %981 = vmatpush1.msra.mxu0 0.0
        %982 = vmatprep.subr.mxu0 0.0
        %983 = vmatpush1.msra.mxu0 0.0
        %984 = vmatprep.subr.mxu0 0.0
        %985 = vmatpush1.msra.mxu0 0.0
        %986 = vmatprep.subr.mxu0 0.0
        %987 = vmatpush1.msra.mxu0 0.0
        %988 = vmatprep.subr.mxu0 0.0
        %989 = vmatpush1.msra.mxu0 0.0
        %990 = vmatprep.subr.mxu0 0.0
        %991 = vmatpush1.msra.mxu0 0.0
        %992 = vmatprep.subr.mxu0 0.0
        %993 = vmatpush1.msra.mxu0 0.0
        %994 = vmatprep.subr.mxu0 0.0
        %995 = vmatpush1.msra.mxu0 0.0
        %996 = vmatprep.subr.mxu0 0.0
        %997 = vmatpush1.msra.mxu0 0.0
        %998 = vmatprep.mubr.f32.mxu0 0.0
        %v999 = vand.u32 %v312, 4294901760
        %1000 = vmatmul.mubr.f32.gmra.mrb[0].mxu0 %v999
        %v1001 = vpop.f32.mrb[0].mxu0
        %v1002 = vadd.f32 %v907, %v1001
        %v1003 = vpop.f32.mrb[0].mxu0
        %v1004 = vadd.f32 %v909, %v1003
        %1005 = vmatprep.mubr.f32.mxu0 0.0
        %v1006 = vand.u32 %v315, 4294901760
        %1007 = vmatmul.mubr.f32.gmra.mrb[0].mxu0 %v1006
        %v1008 = vpop.f32.mrb[0].mxu0
        %v1009 = vadd.f32 %v914, %v1008
        %v1010 = vpop.f32.mrb[0].mxu0
        %v1011 = vadd.f32 %v916, %v1010
        %1012 = vdwg.mxu0
        %1013 = vst [vmem:[%s238] sm:$0xff] %v1002
        %1014 = vst [vmem:[%s238 + $0x8] sm:$0xff] %v1004
        %1015 = vst [vmem:[%s238 + $0x10] sm:$0xff] %v1002
        %1016 = vst [vmem:[%s238 + $0x18] sm:$0xff] %v1004
        %1017 = vst [vmem:[%s238 + $0x20] sm:$0xff] %v1009
        %1018 = vst [vmem:[%s238 + $0x28] sm:$0xff] %v1011
        %1019 = vst [vmem:[%s238 + $0x30] sm:$0xff] %v1009
        %1020 = vst [vmem:[%s238 + $0x38] sm:$0xff] %v1011
        %s1021 = sand.u32 %s126, 1
        %s1022 = scalar_lea.sflag [#allocation4], %s1021
        %s1023 = sand.u32 %s126, 1
        %s1024 = smul.addr %s1023, 64
        %s1025 = scalar_lea.vmem [#allocation5], %s1024
        // Predicated region
        $region41: #{tpu_custom_call.1} parent=35 // pred_check
          %p1026 = pneg %p136
        $region42: #{tpu_custom_call.1} parent=35 // pred_check_branch
          %1028 = sbr.rel (%p1026) target = $region44
        $region43: #{tpu_custom_call.1} parent=35 // pred_region
          %s1029 = smul.u32 2, %s19
          %s1031 = ssub.s32 1024, 1024
          %1032 = vsyncadd %s1022, %s1031
          %s1033 = smul.addr %s1029, 4
          %s1034 = smul.addr %s1033, 128
          %s1035 = scalar_lea.hbm %s4, %s1034
          %s1036 = sshll.u32 %s1025, 4
          %s1037 = int_to_ptr.vmem [resolvable:$true] %s1036
          %1042 = dma.vmem_to_hbm [thread:$0]  %s1037, 1024, %s1035, %s1022, 512, 512, 32
        $region44: #{tpu_custom_call.1} parent=35 // pred_fallthru
          _
      $region36: #{tpu_custom_call.1} parent=5 // pred_fallthru
        _
      %p1043 = scmp.le.s32.totalorder 2, %s14
      // Predicated region
      $region45: #{tpu_custom_call.1} parent=5 // pred_check
        %p1044 = pneg %p1043
      $region46: #{tpu_custom_call.1} parent=5 // pred_check_branch
        %1046 = sbr.rel (%p1044) target = $region48
      $region47: #{tpu_custom_call.1} parent=5 // pred_region
        %s1047 = ssub.s32 %s14, 2
        // Predicated region
        $region49: #{tpu_custom_call.1} parent=47 // pred_check
          %p1048 = pneg %p142
        $region50: #{tpu_custom_call.1} parent=47 // pred_check_branch
          %1050 = sbr.rel (%p1048) target = $region52
        $region51: #{tpu_custom_call.1} parent=47 // pred_region
          %s1051 = sand.u32 %s127, 1
          %s1052 = scalar_lea.sflag [#allocation4], %s1051
          %s1053 = sand.u32 %s127, 1
          %s1054 = smul.addr %s1053, 64
          %s1055 = scalar_lea.vmem [#allocation5], %s1054
          %1056 = dma.done %s1052, 1024
        $region52: #{tpu_custom_call.1} parent=47 // pred_fallthru
          _
      $region48: #{tpu_custom_call.1} parent=5 // pred_fallthru
        _
    $region6: #{tpu_custom_call.1} parent=1 // loop_footer
      %s18 = sadd.s32 1, %s14
    $region7: #{tpu_custom_call.1} parent=1 // loop_footer_branch
      %13 = sbr.rel target = $region3
    $region8: #{tpu_custom_call.1} parent=1 // loop_exit
      _
    %1057 = vsyncpa [#allocation3], 1
    %s1058 = scalar_lea.sflag [#allocation3], 1
    %1059 = vsyncpa %s1058, 1
    %1060 = vsyncpa [#allocation4], 1
    %s1061 = scalar_lea.sflag [#allocation4], 1
    %1062 = vsyncpa %s1061, 1

</llo_original>
